<compile_context>
chip_gen: v5e
topology: v5e:2x2
jax: 0.10.0
libtpu: 0.0.40
codegen_flags: <defaults>
</compile_context>

<pallas_src>
import functools

import jax
import jax.numpy as jnp
from jax.experimental import pallas as pl
from jax.experimental.pallas import tpu as pltpu

_MiB = 1024 * 1024


def _round_up(x, m):
    return (x + m - 1) // m * m


def _vmem_capacity_bytes():
    """Physical VMEM per core; conservative v7x fallback if query fails."""
    try:
        return int(pltpu.get_tpu_info().vmem_capacity_bytes)
    except Exception:  # pragma: no cover - version / backend dependent
        return 64 * _MiB


def _vmem_estimate_bytes(tile_n, k, k_chunk, d, x_itemsize):
    """Rough VMEM footprint: double-buffered pipeline tiles + kernel temporaries."""
    dbl = 2
    kc = min(k, k_chunk)
    buffers = dbl * (2 * tile_n * d * x_itemsize   # x in + z_q out tiles
                     + 2 * tile_n * 4              # idx + err (tile_n, 1) tiles
                     + k * d * 4                   # codebook (constant block)
                     + k * 4)                      # codebook norms
    interm = 3 * tile_n * kc * 4 + 4 * tile_n * d * 4
    return buffers + interm


def _pick_tile_n(n, k, k_chunk, d, x_itemsize, requested_tile_n, vmem_budget):
    """Biggest row tile (multiple of 8) that fits the VMEM budget."""
    tile = max(8, min(_round_up(requested_tile_n, 8), _round_up(max(n, 1), 8)))
    while tile > 8 and _vmem_estimate_bytes(tile, k, k_chunk, d,
                                            x_itemsize) > vmem_budget:
        tile = max(8, _round_up(tile // 2, 8))
    return tile


def _vq_kernel(x_ref, cb_ref, cbsqr_ref, zq_ref, idx_ref, err_ref, *, k_chunk):
    """Quantize one (tile_n, D) slab of rows against the full (K, D) codebook."""
    x = x_ref[...].astype(jnp.float32)            # (tile_n, D)
    tile_n, d = x.shape
    k = cb_ref.shape[0]

    # NT dot: contract the D axis of x with the D axis of the codebook so the
    # MXU consumes the codebook as stored (no KxD transpose / relayout).
    nt_dims = (((1,), (1,)), ((), ()))

    # argmin_k ||x - c_k||^2 == argmin_k (||c_k||^2 - 2 x.c_k); ||x||^2 is a
    # per-row constant and is dropped.  K is processed in static chunks so the
    # (tile_n, K) intermediates never exceed (tile_n, k_chunk).
    best = jnp.full((tile_n, 1), jnp.inf, dtype=jnp.float32)
    best_idx = jnp.zeros((tile_n, 1), dtype=jnp.int32)
    for c0 in range(0, k, k_chunk):
        kc = min(k_chunk, k - c0)
        cb_c = cb_ref[c0:c0 + kc, :]                             # (kc, D) f32
        score = cbsqr_ref[:, c0:c0 + kc] - 2.0 * jax.lax.dot_general(
            x, cb_c, nt_dims, preferred_element_type=jnp.float32)  # (tile_n, kc)
        cmin = jnp.min(score, axis=1, keepdims=True)
        cidx = jnp.argmin(score, axis=1).astype(jnp.int32)[:, None] + c0
        better = cmin < best            # strict '<' keeps first-occurrence ties
        best_idx = jnp.where(better, cidx, best_idx)
        best = jnp.where(better, cmin, best)

    # Gather nearest codebook rows via chunk-wise one-hot matmuls (MXU gather).
    z_q = jnp.zeros((tile_n, d), dtype=jnp.float32)
    for c0 in range(0, k, k_chunk):
        kc = min(k_chunk, k - c0)
        cb_c = cb_ref[c0:c0 + kc, :]
        onehot = (best_idx - c0
                  == jax.lax.broadcasted_iota(jnp.int32, (tile_n, kc), 1)
                  ).astype(jnp.float32)                          # (tile_n, kc)
        z_q = z_q + jnp.dot(onehot, cb_c, preferred_element_type=jnp.float32)

    zq_ref[...] = z_q.astype(zq_ref.dtype)
    idx_ref[...] = best_idx                                      # (tile_n, 1)

    # Per-row squared-error partial sums; final mean is taken in the wrapper.
    diff = z_q - x
    err_ref[...] = jnp.sum(diff * diff, axis=1, keepdims=True)   # (tile_n, 1)


def vector_quantize_forward(x, codebook, get_losses=True, dim=-1,
                            tile_n=512, k_chunk=2048):
    """JAX/Pallas equivalent of VectorQuantize.forward (eval mode, no EMA).

    Returns (z_q, (vq_loss, commit_loss), indices) like the PyTorch module.
    In the forward pass vq_loss and commit_loss are numerically identical
    (the .detach() calls only affect gradients).
    """
    if dim != -1:
        x = jnp.moveaxis(x, dim, -1)
    orig_shape = x.shape
    d = x.shape[-1]
    z_e = x.reshape(-1, d)
    n = z_e.shape[0]
    k = codebook.shape[0]

    # Codebook cast + ||c_k||^2 computed once in the wrapper (not per tile).
    cb_f32 = codebook.astype(jnp.float32)
    cb_sqr = jnp.sum(cb_f32 * cb_f32, axis=1)[None, :]           # (1, K)

    kce = max(1, min(k, int(k_chunk)))

    # Generation-aware VMEM budgeting (v5e/v6e: 128 MiB, v7x: 64 MiB).
    vmem_cap = _vmem_capacity_bytes()
    vmem_budget = int(0.7 * vmem_cap)
    itemsize = jnp.dtype(x.dtype).itemsize
    tn = _pick_tile_n(n, k, kce, d, itemsize, tile_n, vmem_budget)
    num_tiles = (n + tn - 1) // tn

    est = _vmem_estimate_bytes(tn, k, kce, d, itemsize)
    vmem_limit = int(min(0.95 * vmem_cap, max(32 * _MiB, 1.3 * est)))

    kernel = functools.partial(_vq_kernel, k_chunk=kce)

    z_q, idx, err = pl.pallas_call(
        kernel,
        out_shape=(
            jax.ShapeDtypeStruct((n, d), x.dtype),
            jax.ShapeDtypeStruct((n, 1), jnp.int32),
            jax.ShapeDtypeStruct((n, 1), jnp.float32),
        ),
        grid_spec=pltpu.PrefetchScalarGridSpec(
            num_scalar_prefetch=0,
            grid=(num_tiles,),
            in_specs=[
                pl.BlockSpec((tn, d), lambda i: (i, 0)),   # x rows (ragged last)
                pl.BlockSpec((k, d), lambda i: (0, 0)),    # codebook (resident)
                pl.BlockSpec((1, k), lambda i: (0, 0)),    # codebook norms
            ],
            out_specs=[
                pl.BlockSpec((tn, d), lambda i: (i, 0)),   # quantized rows
                pl.BlockSpec((tn, 1), lambda i: (i, 0)),   # indices
                pl.BlockSpec((tn, 1), lambda i: (i, 0)),   # per-row sq-error
            ],
        ),
        compiler_params=pltpu.CompilerParams(
            dimension_semantics=("parallel",),             # no cross-step deps
            vmem_limit_bytes=vmem_limit),
    )(z_e, cb_f32, cb_sqr)

    indices = idx[:, 0]

    vq_loss, commit_loss = None, None
    if get_losses:
        # err has exactly n rows (ragged writes are masked), so no slicing.
        mean_err = jnp.sum(err) / jnp.float32(n * d)
        vq_loss = mean_err
        commit_loss = mean_err

    z_q = z_q.reshape(orig_shape)
    if dim != -1:
        z_q = jnp.moveaxis(z_q, -1, dim)
    return z_q, (vq_loss, commit_loss), indices.reshape(orig_shape[:-1])


def _reference_forward(x, codebook):
    """Pure-jnp reference matching the PyTorch semantics (for sanity check)."""
    z_e = x.reshape(-1, x.shape[-1])
    dist = (jnp.sum(z_e ** 2, axis=1, keepdims=True)
            + jnp.sum(codebook ** 2, axis=1)[None, :]
            - 2.0 * z_e @ codebook.T)
    idx = jnp.argmin(dist, axis=1)
    z_q = codebook[idx]
    loss = jnp.mean((z_q - z_e) ** 2)
    return z_q.reshape(x.shape), loss, idx.reshape(x.shape[:-1])


if __name__ == "__main__":
    embedding_size = 32
    k = 128

    key = jax.random.PRNGKey(0)
    k_cb, k_x1, k_x2 = jax.random.split(key, 3)

    # nn.Embedding(k, embedding_size) with uniform_(-1/k, 1/k) init.
    codebook = jax.random.uniform(
        k_cb, (k, embedding_size), dtype=jnp.float32,
        minval=-1.0 / k, maxval=1.0 / k)

    # Case 1: (batch=2, seq=8, D=32) -> single-tile grid.
    x1 = jax.random.normal(k_x1, (2, 8, embedding_size), dtype=jnp.float32)
    z_q, (vq_loss, commit_loss), indices = vector_quantize_forward(
        x1, codebook, get_losses=True, dim=-1)
    jax.block_until_ready((z_q, vq_loss, commit_loss, indices))

    z_q_ref, loss_ref, idx_ref = _reference_forward(x1, codebook)
    assert jnp.allclose(z_q, z_q_ref, atol=1e-5), "quantized output mismatch"
    assert jnp.allclose(vq_loss, loss_ref, atol=1e-5), "vq_loss mismatch"
    assert jnp.allclose(commit_loss, loss_ref, atol=1e-5), "commit_loss mismatch"
    assert jnp.array_equal(indices, idx_ref.astype(indices.dtype)), "indices mismatch"

    # Case 2: n=21 rows with tile_n=8 -> multi-tile grid with a ragged last
    # block (exercises the no-pad / masked-ragged-write path).
    x2 = jax.random.normal(k_x2, (3, 7, embedding_size), dtype=jnp.float32)
    z_q2, (vq_loss2, _), indices2 = vector_quantize_forward(
        x2, codebook, get_losses=True, dim=-1, tile_n=8)
    jax.block_until_ready((z_q2, vq_loss2, indices2))

    z_q2_ref, loss2_ref, idx2_ref = _reference_forward(x2, codebook)
    assert jnp.allclose(z_q2, z_q2_ref, atol=1e-5), "ragged quantized mismatch"
    assert jnp.allclose(vq_loss2, loss2_ref, atol=1e-5), "ragged loss mismatch"
    assert jnp.array_equal(indices2, idx2_ref.astype(indices2.dtype)), "ragged idx mismatch"

    # TODO(synk): EMA codebook update (_updateEMA) and the custom backward
    # (straight-through / index_add grads) are training-only and not implemented.
    print("KERNEL_OK")
</pallas_src>

<mosaic_0001>
module attributes {stable_mosaic.version = 11 : i64} {
  func.func @_vq_kernel(%arg0: i32, %arg1: memref<16x32xf32, #tpu.memory_space<vmem>>, %arg2: memref<128x32xf32, #tpu.memory_space<vmem>>, %arg3: memref<1x128xf32, #tpu.memory_space<vmem>>, %arg4: memref<16x32xf32, #tpu.memory_space<vmem>>, %arg5: memref<16x1xi32, #tpu.memory_space<vmem>>, %arg6: memref<16x1xf32, #tpu.memory_space<vmem>>) attributes {dimension_semantics = [#tpu.dimension_semantics<parallel>], iteration_bounds = array<i64: 1>, scalar_prefetch = 0 : i64, scratch_operands = 0 : i64, tpu.core_type = #tpu.core_type<tc>, window_params = [{transform_indices = @transform_0, window_bounds = array<i64: 16, 32>}, {pipeline_mode = #tpu.pipeline_mode<synchronous>, transform_indices = @transform_1, window_bounds = array<i64: 128, 32>}, {pipeline_mode = #tpu.pipeline_mode<synchronous>, transform_indices = @transform_2, window_bounds = array<i64: 1, 128>}, {transform_indices = @transform_3, window_bounds = array<i64: 16, 32>}, {transform_indices = @transform_4, window_bounds = array<i64: 16, 1>}, {transform_indices = @transform_5, window_bounds = array<i64: 16, 1>}]} {
    %c0 = arith.constant 0 : index
    %c0_0 = arith.constant 0 : index
    %0 = vector.load %arg1[%c0, %c0_0] : memref<16x32xf32, #tpu.memory_space<vmem>>, vector<16x32xf32>
    %cst = arith.constant 0x7F800000 : f32
    %1 = vector.broadcast %cst : f32 to vector<16x1xf32>
    %c0_i32 = arith.constant 0 : i32
    %2 = vector.broadcast %c0_i32 : i32 to vector<16x1xi32>
    %c0_1 = arith.constant 0 : index
    %c0_2 = arith.constant 0 : index
    %3 = vector.load %arg2[%c0_1, %c0_2] : memref<128x32xf32, #tpu.memory_space<vmem>>, vector<128x32xf32>
    %c0_3 = arith.constant 0 : index
    %c0_4 = arith.constant 0 : index
    %4 = vector.load %arg3[%c0_3, %c0_4] : memref<1x128xf32, #tpu.memory_space<vmem>>, vector<1x128xf32>
    %cst_5 = arith.constant dense<0.000000e+00> : vector<16x128xf32>
    %5 = tpu.matmul %0, %3, %cst_5 {dimension_numbers = #tpu.dot_dimension_numbers<[1], [1], [0], [0], [0, 0, 1, 0], [], []>} : vector<16x32xf32>, vector<128x32xf32>, vector<16x128xf32> -> vector<16x128xf32>
    %cst_6 = arith.constant 2.000000e+00 : f32
    %6 = vector.broadcast %cst_6 : f32 to vector<16x128xf32>
    %7 = arith.mulf %6, %5 : vector<16x128xf32>
    %8 = vector.broadcast %4 : vector<1x128xf32> to vector<16x128xf32>
    %9 = arith.subf %8, %7 : vector<16x128xf32>
    %cst_7 = arith.constant dense<0x7F800000> : vector<16xf32>
    %10 = vector.multi_reduction <minimumf>, %9, %cst_7 [1] : vector<16x128xf32> to vector<16xf32>
    %11 = vector.shape_cast %10 : vector<16xf32> to vector<16x1xf32>
    %12 = tpu.reduce_index %9 {axis = 1 : i32, kind = #tpu.reduction_kind<arg_min>} : vector<16x128xf32> -> vector<16xi32>
    %13 = vector.shape_cast %12 : vector<16xi32> to vector<16x1xi32>
    %c0_i32_8 = arith.constant 0 : i32
    %14 = vector.broadcast %c0_i32_8 : i32 to vector<16x1xi32>
    %15 = arith.addi %13, %14 : vector<16x1xi32>
    %16 = arith.cmpf olt, %11, %1 : vector<16x1xf32>
    %17 = arith.select %16, %15, %2 : vector<16x1xi1>, vector<16x1xi32>
    %cst_9 = arith.constant 0.000000e+00 : f32
    %18 = vector.broadcast %cst_9 : f32 to vector<16x32xf32>
    %c0_10 = arith.constant 0 : index
    %c0_11 = arith.constant 0 : index
    %19 = vector.load %arg2[%c0_10, %c0_11] : memref<128x32xf32, #tpu.memory_space<vmem>>, vector<128x32xf32>
    %c0_i32_12 = arith.constant 0 : i32
    %20 = vector.broadcast %c0_i32_12 : i32 to vector<16x1xi32>
    %21 = arith.subi %17, %20 : vector<16x1xi32>
    %22 = tpu.iota {dimensions = array<i32: 1>} : vector<16x128xi32>
    %23 = vector.broadcast %21 : vector<16x1xi32> to vector<16x128xi32>
    %24 = arith.cmpi eq, %23, %22 : vector<16x128xi32>
    %25 = arith.extui %24 : vector<16x128xi1> to vector<16x128xi32>
    %26 = arith.sitofp %25 : vector<16x128xi32> to vector<16x128xf32>
    %cst_13 = arith.constant dense<0.000000e+00> : vector<16x32xf32>
    %27 = tpu.matmul %26, %19, %cst_13 {dimension_numbers = #tpu.dot_dimension_numbers<[1], [0], [0], [1], [0, 0, 1, 1], [], []>} : vector<16x128xf32>, vector<128x32xf32>, vector<16x32xf32> -> vector<16x32xf32>
    %28 = arith.addf %18, %27 : vector<16x32xf32>
    %c0_14 = arith.constant 0 : index
    %c0_15 = arith.constant 0 : index
    %29 = vector.load %arg4[%c0_14, %c0_15] : memref<16x32xf32, #tpu.memory_space<vmem>>, vector<16x32xf32>
    tpu.vector_store %arg4[%c0_14, %c0_15], %28 {strides = array<i32>} : memref<16x32xf32, #tpu.memory_space<vmem>>, vector<16x32xf32>,
    %c0_16 = arith.constant 0 : index
    %c0_17 = arith.constant 0 : index
    %30 = vector.load %arg5[%c0_16, %c0_17] : memref<16x1xi32, #tpu.memory_space<vmem>>, vector<16x1xi32>
    tpu.vector_store %arg5[%c0_16, %c0_17], %17 {strides = array<i32>} : memref<16x1xi32, #tpu.memory_space<vmem>>, vector<16x1xi32>,
    %31 = arith.subf %28, %0 : vector<16x32xf32>
    %32 = arith.mulf %31, %31 : vector<16x32xf32>
    %cst_18 = arith.constant dense<0.000000e+00> : vector<16xf32>
    %33 = vector.multi_reduction <add>, %32, %cst_18 [1] : vector<16x32xf32> to vector<16xf32>
    %34 = vector.shape_cast %33 : vector<16xf32> to vector<16x1xf32>
    %c0_19 = arith.constant 0 : index
    %c0_20 = arith.constant 0 : index
    %35 = vector.load %arg6[%c0_19, %c0_20] : memref<16x1xf32, #tpu.memory_space<vmem>>, vector<16x1xf32>
    tpu.vector_store %arg6[%c0_19, %c0_20], %34 {strides = array<i32>} : memref<16x1xf32, #tpu.memory_space<vmem>>, vector<16x1xf32>,
    return
  }
  func.func @transform_0(%arg0: i32) -> (i32, i32) {
    %c0_i32 = arith.constant 0 : i32
    %c0_i32_0 = arith.constant 0 : i32
    return %arg0, %c0_i32 : i32, i32
  }
  func.func @transform_1(%arg0: i32) -> (i32, i32) {
    %c0_i32 = arith.constant 0 : i32
    %c0_i32_0 = arith.constant 0 : i32
    %c0_i32_1 = arith.constant 0 : i32
    return %c0_i32, %c0_i32_0 : i32, i32
  }
  func.func @transform_2(%arg0: i32) -> (i32, i32) {
    %c0_i32 = arith.constant 0 : i32
    %c0_i32_0 = arith.constant 0 : i32
    %c0_i32_1 = arith.constant 0 : i32
    return %c0_i32, %c0_i32_0 : i32, i32
  }
  func.func @transform_3(%arg0: i32) -> (i32, i32) {
    %c0_i32 = arith.constant 0 : i32
    %c0_i32_0 = arith.constant 0 : i32
    return %arg0, %c0_i32 : i32, i32
  }
  func.func @transform_4(%arg0: i32) -> (i32, i32) {
    %c0_i32 = arith.constant 0 : i32
    %c0_i32_0 = arith.constant 0 : i32
    return %arg0, %c0_i32 : i32, i32
  }
  func.func @transform_5(%arg0: i32) -> (i32, i32) {
    %c0_i32 = arith.constant 0 : i32
    %c0_i32_0 = arith.constant 0 : i32
    return %arg0, %c0_i32 : i32, i32
  }
}

</mosaic_0001>

<llo_original>
// kernel: tpu_custom_call.1
$region0: #{tpu_custom_call.1}
  #allocation0 [shape = 'u32[]', space=smem, size = 0x4, offset = 0x4, fixed_abs, tag = 'smem constant byte address 0x4 - core index']
  #allocation1 [shape = 'u32[72,128]{1,0:T(1,128)}', space=vmem, size = 0x9000, scoped, tag = 'internal scratch']
  %s0 = inlined_call_operand.vmem [shape: f32[16,32], index: 0, kind: input, shape index: {}]
  %s1 = inlined_call_operand.vmem [shape: f32[128,32], index: 1, kind: input, shape index: {}]
  %s2 = inlined_call_operand.vmem [shape: f32[1,128], index: 2, kind: input, shape index: {}]
  %s3 = inlined_call_operand.hbm [shape: f32[16,32], index: 3, kind: output, shape index: {0}]
  %s4 = inlined_call_operand.vmem [shape: s32[16,1], index: 4, kind: output, shape index: {1}]
  %s5 = inlined_call_operand.vmem [shape: f32[16,1], index: 5, kind: output, shape index: {2}]
  %6 = xla_tuple %s3, %s4, %s5
  %s7 = sld [smem:[#allocation0]]
  $region38: #{tpu_custom_call.1} parent=0
    _
  %s9 = ssub.s32 1, %s7
  %s10 = scalar_select 0, %s9, %s7
  $region1: #{tpu_custom_call.1} parent=0
    #allocation2 [shape = 'u8[8192]{0}', space=vmem, size = 0x2000, scoped, tag = 'output window, operand 0, single buffered']
    #allocation3 [shape = 's32[1]{0}', space=sflag, size = 0x4, scoped, tag = 'scoped memory for tpu_custom_call.1']
    %11 = vsyncpa [#allocation3], 0
    // Predicated region
    $region2: #{tpu_custom_call.1} parent=1 // pred_check
      _
    $region3: #{tpu_custom_call.1} parent=1 // pred_check_branch
      %13 = sbr.rel (0) target = $region5
    $region4: #{tpu_custom_call.1} parent=1 // pred_region
      _
    $region5: #{tpu_custom_call.1} parent=1 // pred_fallthru
      _
    // Predicated region
    $region6: #{tpu_custom_call.1} parent=1 // pred_check
      _
    $region7: #{tpu_custom_call.1} parent=1 // pred_check_branch
      %15 = sbr.rel (0) target = $region9
    $region8: #{tpu_custom_call.1} parent=1 // pred_region
      _
    $region9: #{tpu_custom_call.1} parent=1 // pred_fallthru
      _
    // Predicated region
    $region10: #{tpu_custom_call.1} parent=1 // pred_check
      _
    $region11: #{tpu_custom_call.1} parent=1 // pred_check_branch
      %17 = sbr.rel (0) target = $region13
    $region12: #{tpu_custom_call.1} parent=1 // pred_region
      _
    $region13: #{tpu_custom_call.1} parent=1 // pred_fallthru
      _
    %v18 = vld [vmem:[%s0] sm:$0xff]
    %v19 = vld [vmem:[%s0 + $0x8] sm:$0xff]
    %v20 = vld [vmem:[%s1] sm:$0xff]
    %v21 = vld [vmem:[%s1 + $0x8] sm:$0xff]
    %v22 = vld [vmem:[%s1 + $0x10] sm:$0xff]
    %v23 = vld [vmem:[%s1 + $0x18] sm:$0xff]
    %v24 = vld [vmem:[%s1 + $0x20] sm:$0xff]
    %v25 = vld [vmem:[%s1 + $0x28] sm:$0xff]
    %v26 = vld [vmem:[%s1 + $0x30] sm:$0xff]
    %v27 = vld [vmem:[%s1 + $0x38] sm:$0xff]
    %v28 = vld [vmem:[%s1 + $0x40] sm:$0xff]
    %v29 = vld [vmem:[%s1 + $0x48] sm:$0xff]
    %v30 = vld [vmem:[%s1 + $0x50] sm:$0xff]
    %v31 = vld [vmem:[%s1 + $0x58] sm:$0xff]
    %v32 = vld [vmem:[%s1 + $0x60] sm:$0xff]
    %v33 = vld [vmem:[%s1 + $0x68] sm:$0xff]
    %v34 = vld [vmem:[%s1 + $0x70] sm:$0xff]
    %v35 = vld [vmem:[%s1 + $0x78] sm:$0xff]
    %v36 = vld [vmem:[%s2] sm:$0x1]
    %vm37 = vcmask 261120
    %v39 = vsel %vm37, %v18, 0
    %v42 = vsel %vm37, %v19, 0
    %v45 = vsel %vm37, %v20, 0
    %v48 = vsel %vm37, %v21, 0
    %v51 = vsel %vm37, %v22, 0
    %v54 = vsel %vm37, %v23, 0
    %v57 = vsel %vm37, %v24, 0
    %v60 = vsel %vm37, %v25, 0
    %v63 = vsel %vm37, %v26, 0
    %v66 = vsel %vm37, %v27, 0
    %v69 = vsel %vm37, %v28, 0
    %v72 = vsel %vm37, %v29, 0
    %v75 = vsel %vm37, %v30, 0
    %v78 = vsel %vm37, %v31, 0
    %v81 = vsel %vm37, %v32, 0
    %v84 = vsel %vm37, %v33, 0
    %v87 = vsel %vm37, %v34, 0
    %v90 = vsel %vm37, %v35, 0
    %92 = vmatpush.xpose.msra.mxu0 %v90
    %93 = vmatpush.xpose.msra.mxu0 %v87
    %94 = vmatpush.xpose.msra.mxu0 %v84
    %95 = vmatpush.xpose.msra.mxu0 %v81
    %96 = vmatpush.xpose.msra.mxu0 %v78
    %97 = vmatpush.xpose.msra.mxu0 %v75
    %98 = vmatpush.xpose.msra.mxu0 %v72
    %99 = vmatpush.xpose.msra.mxu0 %v69
    %100 = vmatpush.xpose.msra.mxu0 %v66
    %101 = vmatpush.xpose.msra.mxu0 %v63
    %102 = vmatpush.xpose.msra.mxu0 %v60
    %103 = vmatpush.xpose.msra.mxu0 %v57
    %104 = vmatpush.xpose.msra.mxu0 %v54
    %105 = vmatpush.xpose.msra.mxu0 %v51
    %106 = vmatpush.xpose.msra.mxu0 %v48
    %107 = vmatpush.xpose.msra.mxu0 %v45
    %108 = vmatmul.f32.gmra.mxu0 %v39
    %v109 = vpop.f32.mrf.mxu0
    %v110 = vadd.f32 0.0, %v109
    %111 = vmatmul.f32.gmra.mxu0 %v42
    %v112 = vpop.f32.mrf.mxu0
    %v113 = vadd.f32 0.0, %v112
    %114 = vdwg.mxu0
    %v115 = vmul.f32 %v110, 2.0
    %v116 = vmul.f32 %v113, 2.0
    %v118 = vperm.slane %v36, 0
    %v120 = vsub.f32 %v118, %v115
    %v121 = vsub.f32 %v118, %v116
    %122 = vmin.xlane.f32.xlu0 %v120
    %v123 = vpop.xlane.xlu0 %122
    %124 = vmin.xlane.f32.xlu0 %v121
    %v125 = vpop.xlane.xlu0 %124
    %126 = vmin.index.xlane.f32.xlu0 %v120
    %v127 = vpop.xlane.xlu0 %126
    %128 = vmin.index.xlane.f32.xlu0 %v121
    %v129 = vpop.xlane.xlu0 %128
    %vm130 = vcmp.lt.f32.partialorder %v123, inf
    %vm131 = vcmp.lt.f32.partialorder %v125, inf
    %v132 = vsel %vm130, %v127, 0
    %v133 = vsel %vm131, %v129, 0
    %v134 = vlaneseq
    %v135 = vand.u32 %v134, 127
    %vm136 = vcmp.eq.s32.totalorder %v132, %v135
    %vm137 = vcmp.eq.s32.totalorder %v133, %v135
    %v138 = vsel %vm136, 1, 0
    %v139 = vsel %vm137, 1, 0
    %v140 = vcvt.s32.f32 %v138
    %v141 = vcvt.s32.f32 %v139
    %142 = vmatpush.msra.mxu0 %v35
    %143 = vmatpush.msra.mxu0 %v34
    %144 = vmatpush.msra.mxu0 %v33
    %145 = vmatpush.msra.mxu0 %v32
    %146 = vmatpush.msra.mxu0 %v31
    %147 = vmatpush.msra.mxu0 %v30
    %148 = vmatpush.msra.mxu0 %v29
    %149 = vmatpush.msra.mxu0 %v28
    %150 = vmatpush.msra.mxu0 %v27
    %151 = vmatpush.msra.mxu0 %v26
    %152 = vmatpush.msra.mxu0 %v25
    %153 = vmatpush.msra.mxu0 %v24
    %154 = vmatpush.msra.mxu0 %v23
    %155 = vmatpush.msra.mxu0 %v22
    %156 = vmatpush.msra.mxu0 %v21
    %157 = vmatpush.msra.mxu0 %v20
    %158 = vmatmul.f32.gmra.mxu0 %v140
    %v159 = vpop.f32.mrf.mxu0
    %v160 = vadd.f32 0.0, %v159
    %161 = vmatmul.f32.gmra.mxu0 %v141
    %v162 = vpop.f32.mrf.mxu0
    %v163 = vadd.f32 0.0, %v162
    %164 = vdwg.mxu0
    %165 = vst.msk [vmem:[#allocation2] sm:$0xff] %vm37, %v160
    %166 = vst.msk [vmem:[#allocation2 + $0x8] sm:$0xff] %vm37, %v163
    %vm167 = vcmask 7168
    %168 = vst.msk [vmem:[%s4] sm:$0xff] %vm167, %v132
    %169 = vst.msk [vmem:[%s4 + $0x8] sm:$0xff] %vm167, %v133
    %v170 = vsub.f32 %v160, %v18
    %v171 = vsub.f32 %v163, %v19
    %v172 = vmul.f32 %v170, %v170
    %v173 = vmul.f32 %v171, %v171
    %v174 = vsel %vm37, %v172, 0.0
    %175 = vadd.xlane.f32.xlu0 %v174
    %v176 = vpop.xlane.xlu0 %175
    %v177 = vsel %vm37, %v173, 0.0
    %178 = vadd.xlane.f32.xlu0 %v177
    %v179 = vpop.xlane.xlu0 %178
    %180 = vst.msk [vmem:[%s5] sm:$0xff] %vm167, %v176
    %181 = vst.msk [vmem:[%s5 + $0x8] sm:$0xff] %vm167, %v179
    // Predicated region
    $region14: #{tpu_custom_call.1} parent=1 // pred_check
      _
    $region15: #{tpu_custom_call.1} parent=1 // pred_check_branch
      %183 = sbr.rel (0) target = $region17
    $region16: #{tpu_custom_call.1} parent=1 // pred_region
      %185 = vsyncadd [#allocation3], 0
      %s186 = sshll.u32 [#allocation2], 4
      %s187 = int_to_ptr.vmem [resolvable:$true] %s186
      %s188 = sshll.u32 %s3, 4
      %s189 = int_to_ptr.hbm [resolvable:$true] %s188
      %194 = dma.vmem_to_hbm [thread:$0]  %s187, 256, %s189, [#allocation3], 128, 128, 8
    $region17: #{tpu_custom_call.1} parent=1 // pred_fallthru
      _
    // Predicated region
    $region18: #{tpu_custom_call.1} parent=1 // pred_check
      _
    $region19: #{tpu_custom_call.1} parent=1 // pred_check_branch
      %196 = sbr.rel (0) target = $region21
    $region20: #{tpu_custom_call.1} parent=1 // pred_region
      _
    $region21: #{tpu_custom_call.1} parent=1 // pred_fallthru
      _
    // Predicated region
    $region22: #{tpu_custom_call.1} parent=1 // pred_check
      _
    $region23: #{tpu_custom_call.1} parent=1 // pred_check_branch
      %198 = sbr.rel (0) target = $region25
    $region24: #{tpu_custom_call.1} parent=1 // pred_region
      _
    $region25: #{tpu_custom_call.1} parent=1 // pred_fallthru
      _
    // Predicated region
    $region26: #{tpu_custom_call.1} parent=1 // pred_check
      _
    $region27: #{tpu_custom_call.1} parent=1 // pred_check_branch
      %200 = sbr.rel (0) target = $region29
    $region28: #{tpu_custom_call.1} parent=1 // pred_region
      %202 = dma.done [#allocation3], 256
    $region29: #{tpu_custom_call.1} parent=1 // pred_fallthru
      _
    // Predicated region
    $region30: #{tpu_custom_call.1} parent=1 // pred_check
      _
    $region31: #{tpu_custom_call.1} parent=1 // pred_check_branch
      %204 = sbr.rel (0) target = $region33
    $region32: #{tpu_custom_call.1} parent=1 // pred_region
      _
    $region33: #{tpu_custom_call.1} parent=1 // pred_fallthru
      _
    // Predicated region
    $region34: #{tpu_custom_call.1} parent=1 // pred_check
      _
    $region35: #{tpu_custom_call.1} parent=1 // pred_check_branch
      %206 = sbr.rel (0) target = $region37
    $region36: #{tpu_custom_call.1} parent=1 // pred_region
      _
    $region37: #{tpu_custom_call.1} parent=1 // pred_fallthru
      _
    %207 = vsyncpa [#allocation3], 1

</llo_original>
